<compile_context>
chip_gen: v7x
topology: tpu7x:2x2x1
jax: 0.10.0
libtpu: 0.0.40
codegen_flags: <defaults>
</compile_context>

<pallas_src>
import jax
import jax.numpy as jnp
from jax import lax
from jax.experimental import pallas as pl
from jax.experimental.pallas import tpu as pltpu


def _sdpa_flash_kernel(q_ref, k_ref, v_ref, mask_ref, o_ref, m_sc, l_sc, acc_sc):
    # grid = (B, H, n_q_tiles, n_k_tiles)
    # blocks: q (1,1,tq,D)  k/v (1,1,tk,D)  mask (1,1,tq,tk)  o (1,1,tq,D)
    ki = pl.program_id(3)

    @pl.when(ki == 0)
    def _init():
        m_sc[...] = jnp.full_like(m_sc, -jnp.inf)
        l_sc[...] = jnp.zeros_like(l_sc)
        acc_sc[...] = jnp.zeros_like(acc_sc)

    q = q_ref[0, 0]                                 # (tq, D), native dtype for MXU
    k = k_ref[0, 0]                                 # (tk, D)
    v = v_ref[0, 0]                                 # (tk, D)
    mask = mask_ref[0, 0].astype(jnp.float32)       # (tq, tk) additive mask

    d_head = q.shape[-1]
    scale = float(d_head) ** -0.5
    q_scaled = q * scale                            # fold 1/sqrt(d) into Q once

    # scores = (Q*scale) @ K^T + mask ; contract last dims -> no explicit k.T
    scores = lax.dot_general(
        q_scaled, k,
        dimension_numbers=(((1,), (1,)), ((), ())),
        preferred_element_type=jnp.float32,
    ) + mask                                        # (tq, tk) f32

    # ---- online (flash) softmax across the Lk-tile axis ----
    m_prev = m_sc[...]
    m_new = jnp.maximum(m_prev, jnp.max(scores, axis=-1, keepdims=True))
    alpha = jnp.exp(m_prev - m_new)                 # rescale old accumulators
    p = jnp.exp(scores - m_new)                     # (tq, tk) f32
    l_sc[...] = alpha * l_sc[...] + jnp.sum(p, axis=-1, keepdims=True)
    acc_sc[...] = alpha * acc_sc[...] + lax.dot_general(
        p.astype(v.dtype), v,
        dimension_numbers=(((1,), (0,)), ((), ())),
        preferred_element_type=jnp.float32,
    )
    m_sc[...] = m_new

    @pl.when(ki == pl.num_programs(3) - 1)
    def _finalize():
        # Exact divide (was pl.reciprocal(approx=True), whose error tripped the
        # correctness check). (tq, D) per q-tile -> negligible cost.
        o_ref[0, 0] = (acc_sc[...] / l_sc[...]).astype(o_ref.dtype)


def _pick_tile(extent, preferred, align):
    """Largest tile <= preferred that divides `extent` and stays `align`-aligned;
    falls back to the full extent (always legal for BlockSpec)."""
    if extent <= preferred:
        return extent
    t = (preferred // align) * align
    while t > 0:
        if extent % t == 0:
            return t
        t -= align
    return extent


def scaled_dot_product_attention(Q, K, V, mask=None, *, tq=128, tk=512):
    """Q: [B,H,Lq,D], K/V: [B,H,Lk,D], mask: additive, broadcastable over (B,H)
    with trailing dims [Lq,Lk]. Returns [B,H,Lq,D]."""
    B, H, Lq, D = Q.shape
    Lk = K.shape[2]

    if mask is None:
        mask = jnp.zeros((1, 1, Lq, Lk), jnp.float32)
    assert mask.shape[-2:] == (Lq, Lk), "mask trailing dims must be (Lq, Lk)"

    # Tiles sized to stay well under the 32 MiB default scoped VMEM even on
    # v7x (each double-buffered block is only a few hundred KiB).
    tq = _pick_tile(Lq, tq, 8)      # sublane-aligned when tiled
    tk = _pick_tile(Lk, tk, 128)    # lane-aligned when tiled

    grid = (B, H, Lq // tq, Lk // tk)

    q_spec = pl.BlockSpec((1, 1, tq, D), lambda b, h, qi, ki: (b, h, qi, 0))
    k_spec = pl.BlockSpec((1, 1, tk, D), lambda b, h, qi, ki: (b, h, ki, 0))
    v_spec = pl.BlockSpec((1, 1, tk, D), lambda b, h, qi, ki: (b, h, ki, 0))

    # Support batch/head-broadcast masks without materializing the broadcast.
    b_bcast = mask.shape[0] == 1
    h_bcast = mask.shape[1] == 1

    def mask_index_map(b, h, qi, ki):
        return (0 if b_bcast else b, 0 if h_bcast else h, qi, ki)

    m_spec = pl.BlockSpec((1, 1, tq, tk), mask_index_map)
    o_spec = pl.BlockSpec((1, 1, tq, D), lambda b, h, qi, ki: (b, h, qi, 0))

    return pl.pallas_call(
        _sdpa_flash_kernel,
        out_shape=jax.ShapeDtypeStruct((B, H, Lq, D), Q.dtype),
        grid_spec=pltpu.PrefetchScalarGridSpec(
            num_scalar_prefetch=0,
            grid=grid,
            in_specs=[q_spec, k_spec, v_spec, m_spec],
            out_specs=o_spec,
            scratch_shapes=[
                pltpu.VMEM((tq, 1), jnp.float32),   # running max  m
                pltpu.VMEM((tq, 1), jnp.float32),   # running sum  l
                pltpu.VMEM((tq, D), jnp.float32),   # output accumulator
            ],
        ),
        compiler_params=pltpu.CompilerParams(
            dimension_semantics=("parallel", "parallel", "parallel", "arbitrary"),
        ),
    )(Q, K, V, mask)


def _reference(Q, K, V, mask):
    d = Q.shape[-1]
    scores = jnp.einsum("bhqd,bhkd->bhqk",
                        Q.astype(jnp.float32), K.astype(jnp.float32),
                        precision="highest") / jnp.sqrt(jnp.float32(d)) + mask
    attn = jax.nn.softmax(scores, axis=-1)
    return jnp.einsum("bhqk,bhkd->bhqd", attn, V.astype(jnp.float32),
                      precision="highest")


def _make_inputs(key, batch, n_heads, len_q, len_k, d_head):
    kq, kk, kv = jax.random.split(key, 3)
    Q = jax.random.normal(kq, (batch, n_heads, len_q, d_head), jnp.float32)
    K = jax.random.normal(kk, (batch, n_heads, len_k, d_head), jnp.float32)
    V = jax.random.normal(kv, (batch, n_heads, len_k, d_head), jnp.float32)
    causal = jnp.tril(jnp.ones((len_q, len_k), jnp.float32))
    mask = jnp.where(causal > 0, 0.0, -1e9)
    mask = jnp.broadcast_to(mask, (batch, n_heads, len_q, len_k))
    return Q, K, V, mask


if __name__ == "__main__":
    key = jax.random.PRNGKey(0)
    k1, k2 = jax.random.split(key)

    # Small shapes matching the module (single KV tile path).
    batch, n_heads, seq_len, d_head_sz = 2, 4, 8, 32
    Q, K, V, mask = _make_inputs(k1, batch, n_heads, seq_len, seq_len, d_head_sz)
    out = jax.block_until_ready(scaled_dot_product_attention(Q, K, V, mask))
    ref = _reference(Q, K, V, mask)
    assert out.shape == (batch, n_heads, seq_len, d_head_sz)
    assert jnp.allclose(out, ref, atol=5e-3, rtol=5e-3), "mismatch vs reference (small)"

    # Slightly longer sequence to exercise the multi-tile online-softmax path.
    Q2, K2, V2, mask2 = _make_inputs(k2, 1, 2, 256, 256, 32)
    out2 = jax.block_until_ready(
        scaled_dot_product_attention(Q2, K2, V2, mask2, tq=128, tk=128))
    ref2 = _reference(Q2, K2, V2, mask2)
    assert jnp.allclose(out2, ref2, atol=5e-3, rtol=5e-3), "mismatch vs reference (tiled)"

    print("KERNEL_OK")
</pallas_src>

<mosaic_0001>
module attributes {stable_mosaic.version = 11 : i64} {
  func.func @_sdpa_flash_kernel(%arg0: i32, %arg1: i32, %arg2: i32, %arg3: i32, %arg4: memref<1x1x8x32xf32, #tpu.memory_space<vmem>>, %arg5: memref<1x1x8x32xf32, #tpu.memory_space<vmem>>, %arg6: memref<1x1x8x32xf32, #tpu.memory_space<vmem>>, %arg7: memref<1x1x8x8xf32, #tpu.memory_space<vmem>>, %arg8: memref<1x1x8x32xf32, #tpu.memory_space<vmem>>, %arg9: memref<8x1xf32, #tpu.memory_space<vmem>>, %arg10: memref<8x1xf32, #tpu.memory_space<vmem>>, %arg11: memref<8x32xf32, #tpu.memory_space<vmem>>) attributes {dimension_semantics = [#tpu.dimension_semantics<parallel>, #tpu.dimension_semantics<parallel>, #tpu.dimension_semantics<parallel>, #tpu.dimension_semantics<arbitrary>], iteration_bounds = array<i64: 2, 4, 1, 1>, scalar_prefetch = 0 : i64, scratch_operands = 3 : i64, tpu.core_type = #tpu.core_type<tc>, window_params = [{transform_indices = @transform_0, window_bounds = array<i64: 1, 1, 8, 32>}, {transform_indices = @transform_1, window_bounds = array<i64: 1, 1, 8, 32>}, {transform_indices = @transform_2, window_bounds = array<i64: 1, 1, 8, 32>}, {transform_indices = @transform_3, window_bounds = array<i64: 1, 1, 8, 8>}, {transform_indices = @transform_4, window_bounds = array<i64: 1, 1, 8, 32>}]} {
    %c0_i32 = arith.constant 0 : i32
    %0 = arith.cmpi eq, %arg3, %c0_i32 : i32
    %1 = arith.extui %0 : i1 to i32
    %c0_i32_0 = arith.constant 0 : i32
    %2 = arith.cmpi ne, %1, %c0_i32_0 : i32
    scf.if %2 {
      %cst_34 = arith.constant 0xFF800000 : f32
      %40 = vector.broadcast %cst_34 : f32 to vector<8x1xf32>
      %c0_35 = arith.constant 0 : index
      %c0_36 = arith.constant 0 : index
      %41 = vector.load %arg9[%c0_35, %c0_36] : memref<8x1xf32, #tpu.memory_space<vmem>>, vector<8x1xf32>
      tpu.vector_store %arg9[%c0_35, %c0_36], %40 {strides = array<i32>} : memref<8x1xf32, #tpu.memory_space<vmem>>, vector<8x1xf32>,
      %cst_37 = arith.constant 0.000000e+00 : f32
      %42 = vector.broadcast %cst_37 : f32 to vector<8x1xf32>
      %c0_38 = arith.constant 0 : index
      %c0_39 = arith.constant 0 : index
      %43 = vector.load %arg10[%c0_38, %c0_39] : memref<8x1xf32, #tpu.memory_space<vmem>>, vector<8x1xf32>
      tpu.vector_store %arg10[%c0_38, %c0_39], %42 {strides = array<i32>} : memref<8x1xf32, #tpu.memory_space<vmem>>, vector<8x1xf32>,
      %cst_40 = arith.constant 0.000000e+00 : f32
      %44 = vector.broadcast %cst_40 : f32 to vector<8x32xf32>
      %c0_41 = arith.constant 0 : index
      %c0_42 = arith.constant 0 : index
      %45 = vector.load %arg11[%c0_41, %c0_42] : memref<8x32xf32, #tpu.memory_space<vmem>>, vector<8x32xf32>
      tpu.vector_store %arg11[%c0_41, %c0_42], %44 {strides = array<i32>} : memref<8x32xf32, #tpu.memory_space<vmem>>, vector<8x32xf32>,
    } else {
    }
    %c0 = arith.constant 0 : index
    %c0_1 = arith.constant 0 : index
    %c0_2 = arith.constant 0 : index
    %c0_3 = arith.constant 0 : index
    %3 = vector.load %arg4[%c0, %c0_1, %c0_2, %c0_3] : memref<1x1x8x32xf32, #tpu.memory_space<vmem>>, vector<1x1x8x32xf32>
    %4 = vector.shape_cast %3 : vector<1x1x8x32xf32> to vector<8x32xf32>
    %c0_4 = arith.constant 0 : index
    %c0_5 = arith.constant 0 : index
    %c0_6 = arith.constant 0 : index
    %c0_7 = arith.constant 0 : index
    %5 = vector.load %arg5[%c0_4, %c0_5, %c0_6, %c0_7] : memref<1x1x8x32xf32, #tpu.memory_space<vmem>>, vector<1x1x8x32xf32>
    %6 = vector.shape_cast %5 : vector<1x1x8x32xf32> to vector<8x32xf32>
    %c0_8 = arith.constant 0 : index
    %c0_9 = arith.constant 0 : index
    %c0_10 = arith.constant 0 : index
    %c0_11 = arith.constant 0 : index
    %7 = vector.load %arg6[%c0_8, %c0_9, %c0_10, %c0_11] : memref<1x1x8x32xf32, #tpu.memory_space<vmem>>, vector<1x1x8x32xf32>
    %8 = vector.shape_cast %7 : vector<1x1x8x32xf32> to vector<8x32xf32>
    %c0_12 = arith.constant 0 : index
    %c0_13 = arith.constant 0 : index
    %c0_14 = arith.constant 0 : index
    %c0_15 = arith.constant 0 : index
    %9 = vector.load %arg7[%c0_12, %c0_13, %c0_14, %c0_15] : memref<1x1x8x8xf32, #tpu.memory_space<vmem>>, vector<1x1x8x8xf32>
    %10 = vector.shape_cast %9 : vector<1x1x8x8xf32> to vector<8x8xf32>
    %cst = arith.constant 0.176776692 : f32
    %11 = vector.broadcast %cst : f32 to vector<8x32xf32>
    %12 = arith.mulf %4, %11 : vector<8x32xf32>
    %cst_16 = arith.constant dense<0.000000e+00> : vector<8x8xf32>
    %13 = tpu.matmul %12, %6, %cst_16 {dimension_numbers = #tpu.dot_dimension_numbers<[1], [1], [0], [0], [0, 0, 1, 0], [], []>} : vector<8x32xf32>, vector<8x32xf32>, vector<8x8xf32> -> vector<8x8xf32>
    %14 = arith.addf %13, %10 : vector<8x8xf32>
    %c0_17 = arith.constant 0 : index
    %c0_18 = arith.constant 0 : index
    %15 = vector.load %arg9[%c0_17, %c0_18] : memref<8x1xf32, #tpu.memory_space<vmem>>, vector<8x1xf32>
    %cst_19 = arith.constant dense<0xFF800000> : vector<8xf32>
    %16 = vector.multi_reduction <maximumf>, %14, %cst_19 [1] : vector<8x8xf32> to vector<8xf32>
    %17 = vector.shape_cast %16 : vector<8xf32> to vector<8x1xf32>
    %18 = arith.maximumf %15, %17 : vector<8x1xf32>
    %19 = arith.subf %15, %18 : vector<8x1xf32>
    %20 = math.exp %19 : vector<8x1xf32>
    %21 = vector.broadcast %18 : vector<8x1xf32> to vector<8x8xf32>
    %22 = arith.subf %14, %21 : vector<8x8xf32>
    %23 = math.exp %22 : vector<8x8xf32>
    %c0_20 = arith.constant 0 : index
    %c0_21 = arith.constant 0 : index
    %24 = vector.load %arg10[%c0_20, %c0_21] : memref<8x1xf32, #tpu.memory_space<vmem>>, vector<8x1xf32>
    %25 = arith.mulf %20, %24 : vector<8x1xf32>
    %cst_22 = arith.constant dense<0.000000e+00> : vector<8xf32>
    %26 = vector.multi_reduction <add>, %23, %cst_22 [1] : vector<8x8xf32> to vector<8xf32>
    %27 = vector.shape_cast %26 : vector<8xf32> to vector<8x1xf32>
    %28 = arith.addf %25, %27 : vector<8x1xf32>
    %c0_23 = arith.constant 0 : index
    %c0_24 = arith.constant 0 : index
    %29 = vector.load %arg10[%c0_23, %c0_24] : memref<8x1xf32, #tpu.memory_space<vmem>>, vector<8x1xf32>
    tpu.vector_store %arg10[%c0_23, %c0_24], %28 {strides = array<i32>} : memref<8x1xf32, #tpu.memory_space<vmem>>, vector<8x1xf32>,
    %c0_25 = arith.constant 0 : index
    %c0_26 = arith.constant 0 : index
    %30 = vector.load %arg11[%c0_25, %c0_26] : memref<8x32xf32, #tpu.memory_space<vmem>>, vector<8x32xf32>
    %31 = vector.broadcast %20 : vector<8x1xf32> to vector<8x32xf32>
    %32 = arith.mulf %31, %30 : vector<8x32xf32>
    %cst_27 = arith.constant dense<0.000000e+00> : vector<8x32xf32>
    %33 = tpu.matmul %23, %8, %cst_27 {dimension_numbers = #tpu.dot_dimension_numbers<[1], [0], [0], [1], [0, 0, 1, 1], [], []>} : vector<8x8xf32>, vector<8x32xf32>, vector<8x32xf32> -> vector<8x32xf32>
    %34 = arith.addf %32, %33 : vector<8x32xf32>
    %c0_28 = arith.constant 0 : index
    %c0_29 = arith.constant 0 : index
    %35 = vector.load %arg11[%c0_28, %c0_29] : memref<8x32xf32, #tpu.memory_space<vmem>>, vector<8x32xf32>
    tpu.vector_store %arg11[%c0_28, %c0_29], %34 {strides = array<i32>} : memref<8x32xf32, #tpu.memory_space<vmem>>, vector<8x32xf32>,
    %c0_30 = arith.constant 0 : index
    %c0_31 = arith.constant 0 : index
    %36 = vector.load %arg9[%c0_30, %c0_31] : memref<8x1xf32, #tpu.memory_space<vmem>>, vector<8x1xf32>
    tpu.vector_store %arg9[%c0_30, %c0_31], %18 {strides = array<i32>} : memref<8x1xf32, #tpu.memory_space<vmem>>, vector<8x1xf32>,
    %c0_i32_32 = arith.constant 0 : i32
    %37 = arith.cmpi eq, %arg3, %c0_i32_32 : i32
    %38 = arith.extui %37 : i1 to i32
    %c0_i32_33 = arith.constant 0 : i32
    %39 = arith.cmpi ne, %38, %c0_i32_33 : i32
    scf.if %39 {
      %c0_34 = arith.constant 0 : index
      %c0_35 = arith.constant 0 : index
      %40 = vector.load %arg11[%c0_34, %c0_35] : memref<8x32xf32, #tpu.memory_space<vmem>>, vector<8x32xf32>
      %c0_36 = arith.constant 0 : index
      %c0_37 = arith.constant 0 : index
      %41 = vector.load %arg10[%c0_36, %c0_37] : memref<8x1xf32, #tpu.memory_space<vmem>>, vector<8x1xf32>
      %42 = vector.broadcast %41 : vector<8x1xf32> to vector<8x32xf32>
      %43 = arith.divf %40, %42 : vector<8x32xf32>
      %c0_38 = arith.constant 0 : index
      %c0_39 = arith.constant 0 : index
      %c0_40 = arith.constant 0 : index
      %c0_41 = arith.constant 0 : index
      %44 = vector.load %arg8[%c0_38, %c0_39, %c0_40, %c0_41] : memref<1x1x8x32xf32, #tpu.memory_space<vmem>>, vector<1x1x8x32xf32>
      %45 = vector.shape_cast %44 : vector<1x1x8x32xf32> to vector<8x32xf32>
      %46 = vector.shape_cast %43 : vector<8x32xf32> to vector<1x1x8x32xf32>
      tpu.vector_store %arg8[%c0_38, %c0_39, %c0_40, %c0_41], %46 {strides = array<i32>} : memref<1x1x8x32xf32, #tpu.memory_space<vmem>>, vector<1x1x8x32xf32>,
    } else {
    }
    return
  }
  func.func @transform_0(%arg0: i32, %arg1: i32, %arg2: i32, %arg3: i32) -> (i32, i32, i32, i32) {
    %c0_i32 = arith.constant 0 : i32
    %c0_i32_0 = arith.constant 0 : i32
    return %arg0, %arg1, %arg2, %c0_i32 : i32, i32, i32, i32
  }
  func.func @transform_1(%arg0: i32, %arg1: i32, %arg2: i32, %arg3: i32) -> (i32, i32, i32, i32) {
    %c0_i32 = arith.constant 0 : i32
    %c0_i32_0 = arith.constant 0 : i32
    return %arg0, %arg1, %arg3, %c0_i32 : i32, i32, i32, i32
  }
  func.func @transform_2(%arg0: i32, %arg1: i32, %arg2: i32, %arg3: i32) -> (i32, i32, i32, i32) {
    %c0_i32 = arith.constant 0 : i32
    %c0_i32_0 = arith.constant 0 : i32
    return %arg0, %arg1, %arg3, %c0_i32 : i32, i32, i32, i32
  }
  func.func @transform_3(%arg0: i32, %arg1: i32, %arg2: i32, %arg3: i32) -> (i32, i32, i32, i32) {
    %c0_i32 = arith.constant 0 : i32
    return %arg0, %arg1, %arg2, %arg3 : i32, i32, i32, i32
  }
  func.func @transform_4(%arg0: i32, %arg1: i32, %arg2: i32, %arg3: i32) -> (i32, i32, i32, i32) {
    %c0_i32 = arith.constant 0 : i32
    %c0_i32_0 = arith.constant 0 : i32
    return %arg0, %arg1, %arg2, %c0_i32 : i32, i32, i32, i32
  }
}

</mosaic_0001>

<llo_original>
// kernel: tpu_custom_call.1
$region0: #{tpu_custom_call.1}
  #allocation0 [shape = 'u32[]', space=smem, size = 0x4, offset = 0x4, fixed_abs, tag = 'smem constant byte address 0x4 - core index']
  #allocation1 [shape = 'u32[144,128]{1,0:T(1,128)}', space=vmem, size = 0x12000, scoped, tag = 'internal scratch']
  #allocation2 [shape = 'f32[8,1]{1,0:T(8,128)}', space=vmem, size = 0x1000, scoped, tag = 'scratch operand']
  #allocation3 [shape = 'f32[8,1]{1,0:T(8,128)}', space=vmem, size = 0x1000, scoped, tag = 'scratch operand']
  #allocation4 [shape = 'f32[8,32]{1,0:T(8,128)}', space=vmem, size = 0x1000, scoped, tag = 'scratch operand']
  %s0 = inlined_call_operand.hbm [shape: f32[2,4,8,32], index: 0, kind: input, shape index: {}]
  %s1 = inlined_call_operand.hbm [shape: f32[2,4,8,32], index: 1, kind: input, shape index: {}]
  %s2 = inlined_call_operand.hbm [shape: f32[2,4,8,32], index: 2, kind: input, shape index: {}]
  %s3 = inlined_call_operand.hbm [shape: f32[2,4,8,8], index: 3, kind: input, shape index: {}]
  %s4 = inlined_call_operand.hbm [shape: f32[2,4,8,32], index: 4, kind: output, shape index: {}]
  %s5 = sld [smem:[#allocation0]]
  $region73: #{tpu_custom_call.1} parent=0
    _
  %s7 = ssub.s32 1, %s5
  %s8 = scalar_select 0, %s7, %s5
  $region1: #{tpu_custom_call.1} parent=0
    #allocation5 [shape = 'u8[8192]{0}', space=vmem, size = 0x2000, scoped, tag = 'input window, operand 0']
    #allocation6 [shape = 's32[2]{0}', space=sflag, size = 0x8, scoped, tag = 'scoped memory for tpu_custom_call.1']
    #allocation7 [shape = 's32[2]{0}', space=sflag, size = 0x8, scoped, tag = 'scoped memory for tpu_custom_call.1']
    #allocation8 [shape = 'u8[8192]{0}', space=vmem, size = 0x2000, scoped, tag = 'input window, operand 1']
    #allocation9 [shape = 's32[2]{0}', space=sflag, size = 0x8, scoped, tag = 'scoped memory for tpu_custom_call.1']
    #allocation10 [shape = 'u8[8192]{0}', space=vmem, size = 0x2000, scoped, tag = 'input window, operand 2']
    #allocation11 [shape = 'u8[8192]{0}', space=vmem, size = 0x2000, scoped, tag = 'input window, operand 3']
    #allocation12 [shape = 's32[2]{0}', space=sflag, size = 0x8, scoped, tag = 'scoped memory for tpu_custom_call.1']
    #allocation13 [shape = 'u8[8192]{0}', space=vmem, size = 0x2000, scoped, tag = 'output window, operand 0']
    %9 = vsyncpa [#allocation6], 0
    %s10 = scalar_lea.sflag [#allocation6], 1
    %11 = vsyncpa %s10, 0
    %12 = vsyncpa [#allocation9], 0
    %s13 = scalar_lea.sflag [#allocation9], 1
    %14 = vsyncpa %s13, 0
    %15 = vsyncpa [#allocation12], 0
    %s16 = scalar_lea.sflag [#allocation12], 1
    %17 = vsyncpa %s16, 0
    %18 = vsyncpa [#allocation7], 0
    %s19 = scalar_lea.sflag [#allocation7], 1
    %20 = vsyncpa %s19, 0
    loop: start=0, step=1, limit=10
    $region2: #{tpu_custom_call.1} parent=1 // loop_pre_header
      _
    $region3: #{tpu_custom_call.1} parent=1 // loop_header
      %s22 = sphi 0, %s26
      %p23 = scmp.ge.s32.totalorder %s22, 10
      %s29 = sphi 0, %s55
      %s30 = sphi 0, %s51
      %s31 = sphi 0, %s47
      %s32 = sphi 0, %s43
      %s33 = sphi 0, %s29
      %s34 = sphi 0, %s30
      %s35 = sphi 0, %s31
      %s36 = sphi 0, %s32
      %s37 = sphi 0, %s33
      %s38 = sphi 0, %s34
      %s39 = sphi 0, %s35
      %s40 = sphi 0, %s36
      %s62 = sphi 0, %s64
      %s65 = sphi 0, %s62
      %s66 = sphi 0, %s65
      %s82 = sphi 0, %s66
      %s92 = sphi 0, %s94
      %s95 = sphi 0, %s92
      %s96 = sphi 0, %s95
      %s112 = sphi 0, %s96
      %s122 = sphi 0, %s124
      %s125 = sphi 0, %s122
      %s126 = sphi 0, %s125
      %s142 = sphi 0, %s126
      %s154 = sphi 0, %s156
      %s157 = sphi 0, %s154
      %s158 = sphi 0, %s157
      %s174 = sphi 0, %s158
      %s184 = sphi 0, %s186
      %s187 = sphi 0, %s184
      %s188 = sphi 0, %s187
      %s204 = sphi 0, %s188
    $region4: #{tpu_custom_call.1} parent=1 // loop_header_branch
      %25 = sbr.rel (%p23) target = $region8
    $region5: #{tpu_custom_call.1} parent=1 // loop_body
      %s27 = ssub.s32 %s22, 1
      %s28 = ssub.s32 %s22, 2
      %s41 = sadd.s32 1, %s32
      %p42 = scmp.ge.s32.totalorder %s41, 1
      %s43 = scalar_select %p42, 0, %s41
      %s44 = sadd.s32 1, %s31
      %s45 = scalar_select %p42, %s44, %s31
      %p46 = scmp.ge.s32.totalorder %s45, 1
      %s47 = scalar_select %p46, 0, %s45
      %s48 = sadd.s32 1, %s30
      %s49 = scalar_select %p46, %s48, %s30
      %p50 = scmp.ge.s32.totalorder %s49, 4
      %s51 = scalar_select %p50, 0, %s49
      %s52 = sadd.s32 1, %s29
      %s53 = scalar_select %p50, %s52, %s29
      %p54 = scmp.ge.s32.totalorder %s53, 2
      %s55 = scalar_select %p54, 0, %s53
      %s56 = ssub.s32 %s29, %s55
      %s57 = ssub.s32 %s30, %s51
      %s58 = sor.u32 %s56, %s57
      %s59 = ssub.s32 %s31, %s47
      %s60 = sor.u32 %s58, %s59
      %p61 = scmp.eq.s32.totalorder %s60, 0
      %s63 = sadd.s32 %s62, 1
      %s64 = scalar_select %p61, %s62, %s63
      %p67 = pneg %p61
      %p68 = scmp.eq.s32.totalorder %s22, 7
      %p69 = por %p67, %p68
      %p70 = scmp.ne.s32.totalorder %s62, %s65
      %p71 = scmp.eq.s32.totalorder %s22, 0
      %p72 = por %p70, %p71
      %p73 = scmp.ne.s32.totalorder %s62, %s65
      %p74 = scmp.eq.s32.totalorder %s27, 7
      %p75 = por %p73, %p74
      %p76 = scmp.ne.s32.totalorder %s65, %s66
      %p77 = scmp.eq.s32.totalorder %s27, 0
      %p78 = por %p76, %p77
      %p79 = scmp.ne.s32.totalorder %s65, %s66
      %p80 = scmp.eq.s32.totalorder %s28, 7
      %p81 = por %p79, %p80
      %p83 = scmp.ne.s32.totalorder %s66, %s82
      %p84 = scmp.eq.s32.totalorder %s28, 0
      %p85 = por %p83, %p84
      %s86 = ssub.s32 %s29, %s55
      %s87 = ssub.s32 %s30, %s51
      %s88 = sor.u32 %s86, %s87
      %s89 = ssub.s32 %s32, %s43
      %s90 = sor.u32 %s88, %s89
      %p91 = scmp.eq.s32.totalorder %s90, 0
      %s93 = sadd.s32 %s92, 1
      %s94 = scalar_select %p91, %s92, %s93
      %p97 = pneg %p91
      %p98 = scmp.eq.s32.totalorder %s22, 7
      %p99 = por %p97, %p98
      %p100 = scmp.ne.s32.totalorder %s92, %s95
      %p101 = scmp.eq.s32.totalorder %s22, 0
      %p102 = por %p100, %p101
      %p103 = scmp.ne.s32.totalorder %s92, %s95
      %p104 = scmp.eq.s32.totalorder %s27, 7
      %p105 = por %p103, %p104
      %p106 = scmp.ne.s32.totalorder %s95, %s96
      %p107 = scmp.eq.s32.totalorder %s27, 0
      %p108 = por %p106, %p107
      %p109 = scmp.ne.s32.totalorder %s95, %s96
      %p110 = scmp.eq.s32.totalorder %s28, 7
      %p111 = por %p109, %p110
      %p113 = scmp.ne.s32.totalorder %s96, %s112
      %p114 = scmp.eq.s32.totalorder %s28, 0
      %p115 = por %p113, %p114
      %s116 = ssub.s32 %s29, %s55
      %s117 = ssub.s32 %s30, %s51
      %s118 = sor.u32 %s116, %s117
      %s119 = ssub.s32 %s32, %s43
      %s120 = sor.u32 %s118, %s119
      %p121 = scmp.eq.s32.totalorder %s120, 0
      %s123 = sadd.s32 %s122, 1
      %s124 = scalar_select %p121, %s122, %s123
      %p127 = pneg %p121
      %p128 = scmp.eq.s32.totalorder %s22, 7
      %p129 = por %p127, %p128
      %p130 = scmp.ne.s32.totalorder %s122, %s125
      %p131 = scmp.eq.s32.totalorder %s22, 0
      %p132 = por %p130, %p131
      %p133 = scmp.ne.s32.totalorder %s122, %s125
      %p134 = scmp.eq.s32.totalorder %s27, 7
      %p135 = por %p133, %p134
      %p136 = scmp.ne.s32.totalorder %s125, %s126
      %p137 = scmp.eq.s32.totalorder %s27, 0
      %p138 = por %p136, %p137
      %p139 = scmp.ne.s32.totalorder %s125, %s126
      %p140 = scmp.eq.s32.totalorder %s28, 7
      %p141 = por %p139, %p140
      %p143 = scmp.ne.s32.totalorder %s126, %s142
      %p144 = scmp.eq.s32.totalorder %s28, 0
      %p145 = por %p143, %p144
      %s146 = ssub.s32 %s29, %s55
      %s147 = ssub.s32 %s30, %s51
      %s148 = sor.u32 %s146, %s147
      %s149 = ssub.s32 %s31, %s47
      %s150 = sor.u32 %s148, %s149
      %s151 = ssub.s32 %s32, %s43
      %s152 = sor.u32 %s150, %s151
      %p153 = scmp.eq.s32.totalorder %s152, 0
      %s155 = sadd.s32 %s154, 1
      %s156 = scalar_select %p153, %s154, %s155
      %p159 = pneg %p153
      %p160 = scmp.eq.s32.totalorder %s22, 7
      %p161 = por %p159, %p160
      %p162 = scmp.ne.s32.totalorder %s154, %s157
      %p163 = scmp.eq.s32.totalorder %s22, 0
      %p164 = por %p162, %p163
      %p165 = scmp.ne.s32.totalorder %s154, %s157
      %p166 = scmp.eq.s32.totalorder %s27, 7
      %p167 = por %p165, %p166
      %p168 = scmp.ne.s32.totalorder %s157, %s158
      %p169 = scmp.eq.s32.totalorder %s27, 0
      %p170 = por %p168, %p169
      %p171 = scmp.ne.s32.totalorder %s157, %s158
      %p172 = scmp.eq.s32.totalorder %s28, 7
      %p173 = por %p171, %p172
      %p175 = scmp.ne.s32.totalorder %s158, %s174
      %p176 = scmp.eq.s32.totalorder %s28, 0
      %p177 = por %p175, %p176
      %s178 = ssub.s32 %s29, %s55
      %s179 = ssub.s32 %s30, %s51
      %s180 = sor.u32 %s178, %s179
      %s181 = ssub.s32 %s31, %s47
      %s182 = sor.u32 %s180, %s181
      %p183 = scmp.eq.s32.totalorder %s182, 0
      %s185 = sadd.s32 %s184, 1
      %s186 = scalar_select %p183, %s184, %s185
      %p189 = pneg %p183
      %p190 = scmp.eq.s32.totalorder %s22, 7
      %p191 = por %p189, %p190
      %p192 = scmp.ne.s32.totalorder %s184, %s187
      %p193 = scmp.eq.s32.totalorder %s22, 0
      %p194 = por %p192, %p193
      %p195 = scmp.ne.s32.totalorder %s184, %s187
      %p196 = scmp.eq.s32.totalorder %s27, 7
      %p197 = por %p195, %p196
      %p198 = scmp.ne.s32.totalorder %s187, %s188
      %p199 = scmp.eq.s32.totalorder %s27, 0
      %p200 = por %p198, %p199
      %p201 = scmp.ne.s32.totalorder %s187, %s188
      %p202 = scmp.eq.s32.totalorder %s28, 7
      %p203 = por %p201, %p202
      %p205 = scmp.ne.s32.totalorder %s188, %s204
      %p206 = scmp.eq.s32.totalorder %s28, 0
      %p207 = por %p205, %p206
      %p208 = scmp.le.s32.totalorder 1, %s22
      %p209 = scmp.lt.s32.totalorder %s22, 9
      %p210 = pnand %p208, %p209
      %p211 = pneg %p210
      // Predicated region
      $region9: #{tpu_custom_call.1} parent=5 // pred_check
        _
      $region10: #{tpu_custom_call.1} parent=5 // pred_check_branch
        %213 = sbr.rel (%p210) target = $region12
      $region11: #{tpu_custom_call.1} parent=5 // pred_region
        %s214 = ssub.s32 %s22, 1
      $region12: #{tpu_custom_call.1} parent=5 // pred_fallthru
        _
      %p215 = scmp.lt.s32.totalorder %s22, 8
      // Predicated region
      $region13: #{tpu_custom_call.1} parent=5 // pred_check
        %p216 = pneg %p215
      $region14: #{tpu_custom_call.1} parent=5 // pred_check_branch
        %218 = sbr.rel (%p216) target = $region16
      $region15: #{tpu_custom_call.1} parent=5 // pred_region
        // Predicated region
        $region17: #{tpu_custom_call.1} parent=15 // pred_check
          %p219 = pneg %p72
        $region18: #{tpu_custom_call.1} parent=15 // pred_check_branch
          %221 = sbr.rel (%p219) target = $region20
        $region19: #{tpu_custom_call.1} parent=15 // pred_region
          %s222 = sand.u32 %s62, 1
          %s223 = scalar_lea.sflag [#allocation6], %s222
          %s224 = sand.u32 %s62, 1
          %s225 = smul.addr %s224, 8
          %s226 = scalar_lea.vmem [#allocation5], %s225
          %s228 = ssub.s32 128, 128
          %229 = vsyncadd %s223, %s228
          %s230 = sadd.s32 %s31, %s30
          %s231 = smul.addr %s29, 4
          %s232 = sadd.s32 %s230, %s231
          %s233 = smul.addr %s232, 128
          %s234 = scalar_lea.hbm %s0, %s233
          %s236 = sshll.u32 %s226, 4
          %s237 = int_to_ptr.vmem [resolvable:$true] %s236
          %239 = dma.hbm_to_vmem [thread:$0]  %s234, 128, %s237, %s223
        $region20: #{tpu_custom_call.1} parent=15 // pred_fallthru
          _
        // Predicated region
        $region21: #{tpu_custom_call.1} parent=15 // pred_check
          %p240 = pneg %p102
        $region22: #{tpu_custom_call.1} parent=15 // pred_check_branch
          %242 = sbr.rel (%p240) target = $region24
        $region23: #{tpu_custom_call.1} parent=15 // pred_region
          %s243 = sand.u32 %s22, 1
          %s244 = scalar_lea.sflag [#allocation9], %s243
          %s245 = sand.u32 %s92, 1
          %s246 = smul.addr %s245, 8
          %s247 = scalar_lea.vmem [#allocation8], %s246
          %s249 = ssub.s32 128, 128
          %250 = vsyncadd %s244, %s249
          %s251 = sadd.s32 %s32, %s30
          %s252 = smul.addr %s29, 4
          %s253 = sadd.s32 %s251, %s252
          %s254 = smul.addr %s253, 128
          %s255 = scalar_lea.hbm %s1, %s254
          %s257 = sshll.u32 %s247, 4
          %s258 = int_to_ptr.vmem [resolvable:$true] %s257
          %260 = dma.hbm_to_vmem [thread:$0]  %s255, 128, %s258, %s244
        $region24: #{tpu_custom_call.1} parent=15 // pred_fallthru
          _
        // Predicated region
        $region25: #{tpu_custom_call.1} parent=15 // pred_check
          %p261 = pneg %p132
        $region26: #{tpu_custom_call.1} parent=15 // pred_check_branch
          %263 = sbr.rel (%p261) target = $region28
        $region27: #{tpu_custom_call.1} parent=15 // pred_region
          %s264 = sand.u32 %s22, 1
          %s265 = scalar_lea.sflag [#allocation9], %s264
          %s266 = sand.u32 %s122, 1
          %s267 = smul.addr %s266, 8
          %s268 = scalar_lea.vmem [#allocation10], %s267
          %s270 = ssub.s32 128, 128
          %271 = vsyncadd %s265, %s270
          %s272 = sadd.s32 %s32, %s30
          %s273 = smul.addr %s29, 4
          %s274 = sadd.s32 %s272, %s273
          %s275 = smul.addr %s274, 128
          %s276 = scalar_lea.hbm %s2, %s275
          %s278 = sshll.u32 %s268, 4
          %s279 = int_to_ptr.vmem [resolvable:$true] %s278
          %281 = dma.hbm_to_vmem [thread:$0]  %s276, 128, %s279, %s265
        $region28: #{tpu_custom_call.1} parent=15 // pred_fallthru
          _
        // Predicated region
        $region29: #{tpu_custom_call.1} parent=15 // pred_check
          %p282 = pneg %p164
        $region30: #{tpu_custom_call.1} parent=15 // pred_check_branch
          %284 = sbr.rel (%p282) target = $region32
        $region31: #{tpu_custom_call.1} parent=15 // pred_region
          %s285 = sand.u32 %s154, 1
          %s286 = scalar_lea.sflag [#allocation12], %s285
          %s287 = sand.u32 %s154, 1
          %s288 = smul.addr %s287, 8
          %s289 = scalar_lea.vmem [#allocation11], %s288
          %s291 = ssub.s32 128, 128
          %292 = vsyncadd %s286, %s291
          %s293 = sadd.s32 %s32, %s31
          %s294 = sadd.s32 %s293, %s30
          %s295 = smul.addr %s29, 4
          %s296 = sadd.s32 %s294, %s295
          %s297 = smul.addr %s296, 128
          %s298 = scalar_lea.hbm %s3, %s297
          %s300 = sshll.u32 %s289, 4
          %s301 = int_to_ptr.vmem [resolvable:$true] %s300
          %303 = dma.hbm_to_vmem [thread:$0]  %s298, 128, %s301, %s286
        $region32: #{tpu_custom_call.1} parent=15 // pred_fallthru
          _
      $region16: #{tpu_custom_call.1} parent=5 // pred_fallthru
        _
      %p304 = scmp.le.s32.totalorder 1, %s22
      %p305 = scmp.lt.s32.totalorder %s22, 9
      %p306 = pnand %p304, %p305
      %p307 = pneg %p306
      // Predicated region
      $region33: #{tpu_custom_call.1} parent=5 // pred_check
        _
      $region34: #{tpu_custom_call.1} parent=5 // pred_check_branch
        %309 = sbr.rel (%p306) target = $region36
      $region35: #{tpu_custom_call.1} parent=5 // pred_region
        %s310 = ssub.s32 %s22, 1
        %s311 = sand.u32 %s65, 1
        %s312 = scalar_lea.sflag [#allocation6], %s311
        %s313 = sand.u32 %s65, 1
        %s314 = smul.addr %s313, 8
        %s315 = scalar_lea.vmem [#allocation5], %s314
        // Predicated region
        $region37: #{tpu_custom_call.1} parent=35 // pred_check
          %p316 = pneg %p78
        $region38: #{tpu_custom_call.1} parent=35 // pred_check_branch
          %318 = sbr.rel (%p316) target = $region40
        $region39: #{tpu_custom_call.1} parent=35 // pred_region
          %319 = dma.done %s312, 128
        $region40: #{tpu_custom_call.1} parent=35 // pred_fallthru
          _
        %s320 = sand.u32 %s27, 1
        %s321 = scalar_lea.sflag [#allocation9], %s320
        %s322 = sand.u32 %s95, 1
        %s323 = smul.addr %s322, 8
        %s324 = scalar_lea.vmem [#allocation8], %s323
        // Predicated region
        $region41: #{tpu_custom_call.1} parent=35 // pred_check
          %p325 = pneg %p108
        $region42: #{tpu_custom_call.1} parent=35 // pred_check_branch
          %327 = sbr.rel (%p325) target = $region44
        $region43: #{tpu_custom_call.1} parent=35 // pred_region
          %328 = dma.done %s321, 128
        $region44: #{tpu_custom_call.1} parent=35 // pred_fallthru
          _
        %s329 = sand.u32 %s27, 1
        %s330 = scalar_lea.sflag [#allocation9], %s329
        %s331 = sand.u32 %s125, 1
        %s332 = smul.addr %s331, 8
        %s333 = scalar_lea.vmem [#allocation10], %s332
        // Predicated region
        $region45: #{tpu_custom_call.1} parent=35 // pred_check
          %p334 = pneg %p138
        $region46: #{tpu_custom_call.1} parent=35 // pred_check_branch
          %336 = sbr.rel (%p334) target = $region48
        $region47: #{tpu_custom_call.1} parent=35 // pred_region
          %337 = dma.done %s330, 128
        $region48: #{tpu_custom_call.1} parent=35 // pred_fallthru
          _
        %s338 = sand.u32 %s157, 1
        %s339 = scalar_lea.sflag [#allocation12], %s338
        %s340 = sand.u32 %s157, 1
        %s341 = smul.addr %s340, 8
        %s342 = scalar_lea.vmem [#allocation11], %s341
        // Predicated region
        $region49: #{tpu_custom_call.1} parent=35 // pred_check
          %p343 = pneg %p170
        $region50: #{tpu_custom_call.1} parent=35 // pred_check_branch
          %345 = sbr.rel (%p343) target = $region52
        $region51: #{tpu_custom_call.1} parent=35 // pred_region
          %346 = dma.done %s339, 128
        $region52: #{tpu_custom_call.1} parent=35 // pred_fallthru
          _
        %s347 = sand.u32 %s65, 1
        %s348 = scalar_lea.sflag [#allocation6], %s347
        %s349 = sand.u32 %s65, 1
        %s350 = smul.addr %s349, 8
        %s351 = scalar_lea.vmem [#allocation5], %s350
        %p352 = pneg %p78
        %p353 = pneg %p75
        %s354 = sand.u32 %s27, 1
        %s355 = scalar_lea.sflag [#allocation9], %s354
        %s356 = sand.u32 %s95, 1
        %s357 = smul.addr %s356, 8
        %s358 = scalar_lea.vmem [#allocation8], %s357
        %p359 = pneg %p108
        %p360 = pneg %p105
        %s361 = sand.u32 %s27, 1
        %s362 = scalar_lea.sflag [#allocation9], %s361
        %s363 = sand.u32 %s125, 1
        %s364 = smul.addr %s363, 8
        %s365 = scalar_lea.vmem [#allocation10], %s364
        %p366 = pneg %p138
        %p367 = pneg %p135
        %s368 = sand.u32 %s157, 1
        %s369 = scalar_lea.sflag [#allocation12], %s368
        %s370 = sand.u32 %s157, 1
        %s371 = smul.addr %s370, 8
        %s372 = scalar_lea.vmem [#allocation11], %s371
        %p373 = pneg %p170
        %p374 = pneg %p167
        %p375 = pneg %p200
        %p376 = pneg %p197
        %s377 = sand.u32 %s187, 1
        %s378 = scalar_lea.sflag [#allocation7], %s377
        %s379 = sand.u32 %s187, 1
        %s380 = smul.addr %s379, 8
        %s381 = scalar_lea.vmem [#allocation13], %s380
        %p382 = scmp.eq.s32.totalorder %s36, 0
        // Predicated region
        $region53: #{tpu_custom_call.1} parent=35 // pred_check
          %p383 = pneg %p382
        $region54: #{tpu_custom_call.1} parent=35 // pred_check_branch
          %385 = sbr.rel (%p383) target = $region56
        $region55: #{tpu_custom_call.1} parent=35 // pred_region
          %vm386 = vcmask 7168
          %387 = vst.msk [vmem:[#allocation2] sm:$0xff] %vm386, -inf
          %388 = vst.msk [vmem:[#allocation3] sm:$0xff] %vm386, 0.0
          %vm389 = vcmask 261120
          %390 = vst.msk [vmem:[#allocation4] sm:$0xff] %vm389, 0.0
        $region56: #{tpu_custom_call.1} parent=35 // pred_fallthru
          _
        %v391 = vld [vmem:[%s315] sm:$0xff]
        %v392 = vld [vmem:[%s324] sm:$0xff]
        %v393 = vld [vmem:[%s333] sm:$0xff]
        %v394 = vld [vmem:[%s342] sm:$0xff]
        %v395 = vmul.f32 %v391, 0.17677669
        %vm396 = vcmask 261120
        %v398 = vsel %vm396, %v395, 0
        %v401 = vsel %vm396, %v392, 0
        %403 = vmatprep.subr.mxu0 0.0
        %404 = vmatpush1.xpose.msra.mxu0 %v401
        %405 = vmatprep.subr.mxu0 0.0
        %406 = vmatpush1.xpose.msra.mxu0 0.0
        %407 = vmatprep.subr.mxu0 0.0
        %408 = vmatpush1.xpose.msra.mxu0 0.0
        %409 = vmatprep.subr.mxu0 0.0
        %410 = vmatpush1.xpose.msra.mxu0 0.0
        %411 = vmatprep.subr.mxu0 0.0
        %412 = vmatpush1.xpose.msra.mxu0 0.0
        %413 = vmatprep.subr.mxu0 0.0
        %414 = vmatpush1.xpose.msra.mxu0 0.0
        %415 = vmatprep.subr.mxu0 0.0
        %416 = vmatpush1.xpose.msra.mxu0 0.0
        %417 = vmatprep.subr.mxu0 0.0
        %418 = vmatpush1.xpose.msra.mxu0 0.0
        %419 = vmatprep.subr.mxu0 0.0
        %420 = vmatpush1.xpose.msra.mxu0 0.0
        %421 = vmatprep.subr.mxu0 0.0
        %422 = vmatpush1.xpose.msra.mxu0 0.0
        %423 = vmatprep.subr.mxu0 0.0
        %424 = vmatpush1.xpose.msra.mxu0 0.0
        %425 = vmatprep.subr.mxu0 0.0
        %426 = vmatpush1.xpose.msra.mxu0 0.0
        %427 = vmatprep.subr.mxu0 0.0
        %428 = vmatpush1.xpose.msra.mxu0 0.0
        %429 = vmatprep.subr.mxu0 0.0
        %430 = vmatpush1.xpose.msra.mxu0 0.0
        %431 = vmatprep.subr.mxu0 0.0
        %432 = vmatpush1.xpose.msra.mxu0 0.0
        %433 = vmatprep.subr.mxu0 0.0
        %434 = vmatpush1.xpose.msra.mxu0 0.0
        %435 = vmatprep.subr.mxu0 0.0
        %436 = vmatpush1.xpose.msra.mxu0 0.0
        %437 = vmatprep.subr.mxu0 0.0
        %438 = vmatpush1.xpose.msra.mxu0 0.0
        %439 = vmatprep.subr.mxu0 0.0
        %440 = vmatpush1.xpose.msra.mxu0 0.0
        %441 = vmatprep.subr.mxu0 0.0
        %442 = vmatpush1.xpose.msra.mxu0 0.0
        %443 = vmatprep.subr.mxu0 0.0
        %444 = vmatpush1.xpose.msra.mxu0 0.0
        %445 = vmatprep.subr.mxu0 0.0
        %446 = vmatpush1.xpose.msra.mxu0 0.0
        %447 = vmatprep.subr.mxu0 0.0
        %448 = vmatpush1.xpose.msra.mxu0 0.0
        %449 = vmatprep.subr.mxu0 0.0
        %450 = vmatpush1.xpose.msra.mxu0 0.0
        %451 = vmatprep.subr.mxu0 0.0
        %452 = vmatpush1.xpose.msra.mxu0 0.0
        %453 = vmatprep.subr.mxu0 0.0
        %454 = vmatpush1.xpose.msra.mxu0 0.0
        %455 = vmatprep.subr.mxu0 0.0
        %456 = vmatpush1.xpose.msra.mxu0 0.0
        %457 = vmatprep.subr.mxu0 0.0
        %458 = vmatpush1.xpose.msra.mxu0 0.0
        %459 = vmatprep.subr.mxu0 0.0
        %460 = vmatpush1.xpose.msra.mxu0 0.0
        %461 = vmatprep.subr.mxu0 0.0
        %462 = vmatpush1.xpose.msra.mxu0 0.0
        %463 = vmatprep.subr.mxu0 0.0
        %464 = vmatpush1.xpose.msra.mxu0 0.0
        %465 = vmatprep.subr.mxu0 0.0
        %466 = vmatpush1.xpose.msra.mxu0 0.0
        %467 = vmatprep.mubr.f32.mxu0 0.0
        %468 = vmatmul.mubr.f32.gmra.mrb[0].mxu0 %v398
        %v469 = vpop.f32.mrb[0].mxu0
        %v470 = vadd.f32 %v394, %v469
        %v471 = vpop.f32.mrb[0].mxu0
        %472 = vdwg.mxu0
        %v473 = vld [vmem:[#allocation2] sm:$0xff]
        %vm474 = vcmask 64512
        %v475 = vsel %vm474, %v470, -inf
        %476 = vmax.xlane.f32.xlu0 %v475
        %v477 = vpop.xlane.xlu0 %476
        %v478 = vmax.f32 %v473, %v477
        %v479 = vsub.f32 %v473, %v478
        %v480 = vmul.f32 %v479, 1.442695
        %v481 = vpow.pop %v480
        %483 = vset.pattern.permute.xlu0 0
        %484 = vperm.xlu0 %483, %v478
        %v485 = vpop.permute.xlu0 %484
        %v487 = vsub.f32 %v470, %v485
        %v488 = vmul.f32 %v487, 1.442695
        %v489 = vpow.pop %v488
        %v490 = vld [vmem:[#allocation3] sm:$0xff]
        %v491 = vmul.f32 %v481, %v490
        %v492 = vsel %vm474, %v489, 0.0
        %493 = vadd.xlane.f32.xlu0 %v492
        %v494 = vpop.xlane.xlu0 %493
        %v495 = vadd.f32 %v491, %v494
        %vm496 = vcmask 7168
        %497 = vst.msk [vmem:[#allocation3] sm:$0xff] %vm496, %v495
        %v498 = vld [vmem:[#allocation4] sm:$0xff]
        %500 = vset.pattern.permute.xlu0 0
        %501 = vperm.xlu0 %500, %v481
        %v502 = vpop.permute.xlu0 %501
        %v504 = vmul.f32 %v502, %v498
        %v506 = vsel %vm474, %v489, 0
        %508 = vmatprep.subr.mxu0 0.0
        %509 = vmatpush1.msra.mxu0 %v393
        %510 = vmatprep.subr.mxu0 0.0
        %511 = vmatpush1.msra.mxu0 0.0
        %512 = vmatprep.subr.mxu0 0.0
        %513 = vmatpush1.msra.mxu0 0.0
        %514 = vmatprep.subr.mxu0 0.0
        %515 = vmatpush1.msra.mxu0 0.0
        %516 = vmatprep.subr.mxu0 0.0
        %517 = vmatpush1.msra.mxu0 0.0
        %518 = vmatprep.subr.mxu0 0.0
        %519 = vmatpush1.msra.mxu0 0.0
        %520 = vmatprep.subr.mxu0 0.0
        %521 = vmatpush1.msra.mxu0 0.0
        %522 = vmatprep.subr.mxu0 0.0
        %523 = vmatpush1.msra.mxu0 0.0
        %524 = vmatprep.subr.mxu0 0.0
        %525 = vmatpush1.msra.mxu0 0.0
        %526 = vmatprep.subr.mxu0 0.0
        %527 = vmatpush1.msra.mxu0 0.0
        %528 = vmatprep.subr.mxu0 0.0
        %529 = vmatpush1.msra.mxu0 0.0
        %530 = vmatprep.subr.mxu0 0.0
        %531 = vmatpush1.msra.mxu0 0.0
        %532 = vmatprep.subr.mxu0 0.0
        %533 = vmatpush1.msra.mxu0 0.0
        %534 = vmatprep.subr.mxu0 0.0
        %535 = vmatpush1.msra.mxu0 0.0
        %536 = vmatprep.subr.mxu0 0.0
        %537 = vmatpush1.msra.mxu0 0.0
        %538 = vmatprep.subr.mxu0 0.0
        %539 = vmatpush1.msra.mxu0 0.0
        %540 = vmatprep.subr.mxu0 0.0
        %541 = vmatpush1.msra.mxu0 0.0
        %542 = vmatprep.subr.mxu0 0.0
        %543 = vmatpush1.msra.mxu0 0.0
        %544 = vmatprep.subr.mxu0 0.0
        %545 = vmatpush1.msra.mxu0 0.0
        %546 = vmatprep.subr.mxu0 0.0
        %547 = vmatpush1.msra.mxu0 0.0
        %548 = vmatprep.subr.mxu0 0.0
        %549 = vmatpush1.msra.mxu0 0.0
        %550 = vmatprep.subr.mxu0 0.0
        %551 = vmatpush1.msra.mxu0 0.0
        %552 = vmatprep.subr.mxu0 0.0
        %553 = vmatpush1.msra.mxu0 0.0
        %554 = vmatprep.subr.mxu0 0.0
        %555 = vmatpush1.msra.mxu0 0.0
        %556 = vmatprep.subr.mxu0 0.0
        %557 = vmatpush1.msra.mxu0 0.0
        %558 = vmatprep.subr.mxu0 0.0
        %559 = vmatpush1.msra.mxu0 0.0
        %560 = vmatprep.subr.mxu0 0.0
        %561 = vmatpush1.msra.mxu0 0.0
        %562 = vmatprep.subr.mxu0 0.0
        %563 = vmatpush1.msra.mxu0 0.0
        %564 = vmatprep.subr.mxu0 0.0
        %565 = vmatpush1.msra.mxu0 0.0
        %566 = vmatprep.subr.mxu0 0.0
        %567 = vmatpush1.msra.mxu0 0.0
        %568 = vmatprep.subr.mxu0 0.0
        %569 = vmatpush1.msra.mxu0 0.0
        %570 = vmatprep.subr.mxu0 0.0
        %571 = vmatpush1.msra.mxu0 0.0
        %572 = vmatprep.mubr.f32.mxu0 0.0
        %573 = vmatmul.mubr.f32.gmra.mrb[0].mxu0 %v506
        %v574 = vpop.f32.mrb[0].mxu0
        %v575 = vadd.f32 0.0, %v574
        %v576 = vpop.f32.mrb[0].mxu0
        %577 = vdwg.mxu0
        %v578 = vadd.f32 %v504, %v575
        %579 = vst.msk [vmem:[#allocation4] sm:$0xff] %vm396, %v578
        %580 = vst.msk [vmem:[#allocation2] sm:$0xff] %vm496, %v478
        // Predicated region
        $region57: #{tpu_custom_call.1} parent=35 // pred_check
          %p581 = pneg %p382
        $region58: #{tpu_custom_call.1} parent=35 // pred_check_branch
          %583 = sbr.rel (%p581) target = $region60
        $region59: #{tpu_custom_call.1} parent=35 // pred_region
          %v584 = vld [vmem:[#allocation4] sm:$0xff]
          %v585 = vld [vmem:[#allocation3] sm:$0xff]
          %587 = vset.pattern.permute.xlu0 0
          %588 = vperm.xlu0 %587, %v585
          %v589 = vpop.permute.xlu0 %588
          %v591 = vrcp.pop %v589
          %v592 = vmul.f32 %v584, %v591
          %593 = vst.msk [vmem:[%s381] sm:$0xff] %vm396, %v592
        $region60: #{tpu_custom_call.1} parent=35 // pred_fallthru
          _
        %s594 = sand.u32 %s187, 1
        %s595 = scalar_lea.sflag [#allocation7], %s594
        %s596 = sand.u32 %s187, 1
        %s597 = smul.addr %s596, 8
        %s598 = scalar_lea.vmem [#allocation13], %s597
        // Predicated region
        $region61: #{tpu_custom_call.1} parent=35 // pred_check
          %p599 = pneg %p197
        $region62: #{tpu_custom_call.1} parent=35 // pred_check_branch
          %601 = sbr.rel (%p599) target = $region64
        $region63: #{tpu_custom_call.1} parent=35 // pred_region
          %s603 = ssub.s32 128, 128
          %604 = vsyncadd %s595, %s603
          %s605 = sadd.s32 %s35, %s34
          %s606 = smul.addr %s33, 4
          %s607 = sadd.s32 %s605, %s606
          %s608 = smul.addr %s607, 128
          %s609 = scalar_lea.hbm %s4, %s608
          %s611 = sshll.u32 %s598, 4
          %s612 = int_to_ptr.vmem [resolvable:$true] %s611
          %614 = dma.vmem_to_hbm [thread:$0]  %s612, 128, %s609, %s595
        $region64: #{tpu_custom_call.1} parent=35 // pred_fallthru
          _
      $region36: #{tpu_custom_call.1} parent=5 // pred_fallthru
        _
      %p615 = scmp.le.s32.totalorder 2, %s22
      // Predicated region
      $region65: #{tpu_custom_call.1} parent=5 // pred_check
        %p616 = pneg %p615
      $region66: #{tpu_custom_call.1} parent=5 // pred_check_branch
        %618 = sbr.rel (%p616) target = $region68
      $region67: #{tpu_custom_call.1} parent=5 // pred_region
        %s619 = ssub.s32 %s22, 2
        // Predicated region
        $region69: #{tpu_custom_call.1} parent=67 // pred_check
          %p620 = pneg %p203
        $region70: #{tpu_custom_call.1} parent=67 // pred_check_branch
          %622 = sbr.rel (%p620) target = $region72
        $region71: #{tpu_custom_call.1} parent=67 // pred_region
          %s623 = sand.u32 %s188, 1
          %s624 = scalar_lea.sflag [#allocation7], %s623
          %s625 = sand.u32 %s188, 1
          %s626 = smul.addr %s625, 8
          %s627 = scalar_lea.vmem [#allocation13], %s626
          %628 = dma.done %s624, 128
        $region72: #{tpu_custom_call.1} parent=67 // pred_fallthru
          _
      $region68: #{tpu_custom_call.1} parent=5 // pred_fallthru
        _
    $region6: #{tpu_custom_call.1} parent=1 // loop_footer
      %s26 = sadd.s32 1, %s22
    $region7: #{tpu_custom_call.1} parent=1 // loop_footer_branch
      %21 = sbr.rel target = $region3
    $region8: #{tpu_custom_call.1} parent=1 // loop_exit
      _
    %629 = vsyncpa [#allocation6], 1
    %s630 = scalar_lea.sflag [#allocation6], 1
    %631 = vsyncpa %s630, 1
    %632 = vsyncpa [#allocation9], 1
    %s633 = scalar_lea.sflag [#allocation9], 1
    %634 = vsyncpa %s633, 1
    %635 = vsyncpa [#allocation12], 1
    %s636 = scalar_lea.sflag [#allocation12], 1
    %637 = vsyncpa %s636, 1
    %638 = vsyncpa [#allocation7], 1
    %s639 = scalar_lea.sflag [#allocation7], 1
    %640 = vsyncpa %s639, 1

</llo_original>
